<compile_context>
chip_gen: v7x
topology: tpu7x:2x2x1
jax: 0.10.0
libtpu: 0.0.40
codegen_flags: <defaults>
</compile_context>

<pallas_src>
import functools

import jax
import jax.numpy as jnp
from jax import lax
from jax.experimental import pallas as pl
from jax.experimental.pallas import tpu as pltpu


_SQRT_HALF = 0.7071067811865476       # 1/sqrt(2)
_GELU_TANH_A = 0.7978845608028654     # sqrt(2/pi)
_GELU_TANH_B = 0.044715
_TM_CANDIDATES = (2048, 1024, 512, 256, 128, 64, 32, 16, 8)
_TK_CANDIDATES = (2048, 1024, 512, 256, 128)


def _round_up(v, m):
    return -(-v // m) * m


# --------------------------------------------------------------------------- #
# In-kernel math helpers (all f32)
# --------------------------------------------------------------------------- #
def _gelu_f32(h, approximate):
    if approximate:
        # tanh-approximate GELU: transcendental goes to the EUP bundle slot.
        inner = _GELU_TANH_A * (h + _GELU_TANH_B * h * h * h)
        return 0.5 * h * (1.0 + jnp.tanh(inner))
    # Exact (erf) GELU -- matches torch.nn.GELU() default.
    return 0.5 * h * (1.0 + lax.erf(h * jnp.float32(_SQRT_HALF)))


def _layernorm_f32(r, gamma_row, beta_row, eps=1e-5):
    # Two-pass mean/var (torch.nn.LayerNorm semantics, numerically stable).
    inv_n = jnp.float32(1.0 / r.shape[-1])
    mean = jnp.sum(r, axis=-1, keepdims=True) * inv_n
    c = r - mean
    var = jnp.sum(c * c, axis=-1, keepdims=True) * inv_n
    y = c * lax.rsqrt(var + jnp.float32(eps))
    return y * gamma_row + beta_row


# --------------------------------------------------------------------------- #
# Kernels
# --------------------------------------------------------------------------- #
def _block_kernel(x_ref, w_ref, p_ref, o_ref, *, approximate_gelu, mxu_bf16):
    # x_ref: (TM, S) row tile; w_ref: (S, S) resident pre-transposed weight;
    # p_ref: (3, S) packed params (row0=bias, row1=gamma, row2=beta).
    x = x_ref[...]
    xm, wm = x, w_ref[...]
    if mxu_bf16 and xm.dtype == jnp.float32:
        xm = xm.astype(jnp.bfloat16)
        wm = wm.astype(jnp.bfloat16)

    h = jnp.dot(xm, wm, preferred_element_type=jnp.float32)
    h = h + p_ref[0:1, :].astype(jnp.float32)
    g = _gelu_f32(h, approximate_gelu)
    r = x.astype(jnp.float32) + g
    y = _layernorm_f32(r, p_ref[1:2, :].astype(jnp.float32),
                       p_ref[2:3, :].astype(jnp.float32))
    o_ref[...] = y.astype(o_ref.dtype)


def _block_ksplit_kernel(xk_ref, x_ref, w_ref, p_ref, o_ref, acc_ref, *,
                         approximate_gelu, mxu_bf16):
    # Grid (rows, K//tk). xk_ref: (TM, TK) x K-chunk; x_ref: (TM, S) full-row x
    # (resident across k, used only for the residual); w_ref: (TK, S) weight slab;
    # acc_ref: (TM, S) f32 accumulator scratch.
    k = pl.program_id(1)

    @pl.when(k == 0)
    def _init():
        acc_ref[...] = jnp.zeros_like(acc_ref)

    xc, wc = xk_ref[...], w_ref[...]
    if mxu_bf16 and xc.dtype == jnp.float32:
        xc = xc.astype(jnp.bfloat16)
        wc = wc.astype(jnp.bfloat16)
    acc_ref[...] += jnp.dot(xc, wc, preferred_element_type=jnp.float32)

    @pl.when(k == pl.num_programs(1) - 1)
    def _finalize():
        h = acc_ref[...] + p_ref[0:1, :].astype(jnp.float32)
        g = _gelu_f32(h, approximate_gelu)
        r = x_ref[...].astype(jnp.float32) + g
        y = _layernorm_f32(r, p_ref[1:2, :].astype(jnp.float32),
                           p_ref[2:3, :].astype(jnp.float32))
        o_ref[...] = y.astype(o_ref.dtype)


# --------------------------------------------------------------------------- #
# Generation-aware sizing
# --------------------------------------------------------------------------- #
def _tpu_vmem_and_cores():
    """(per-TensorCore VMEM bytes, TensorCores per chip). Conservative fallback."""
    vmem = None
    try:
        vmem = int(getattr(pltpu.get_tpu_info(), "vmem_capacity_bytes"))
    except Exception:
        vmem = None
    kind = ""
    try:
        kind = jax.devices()[0].device_kind.lower()
    except Exception:
        kind = ""
    two_tc = ("v7" in kind) or ("7x" in kind)
    if vmem is None:
        if two_tc:
            vmem = 64 << 20           # v7x: 64 MiB / TC
        elif kind:
            vmem = 128 << 20          # v5e/v6e/v4: 128 MiB
        else:
            vmem = 64 << 20           # unknown: be conservative
    return vmem, (2 if two_tc else 1)


def _single_pass_vmem(tm, S, x_isz, w_isz, o_isz):
    weight = 2 * S * S * w_isz        # resident weight; Pallas still double-buffers inputs
    params = 2 * 3 * S * 4
    x_buf = 2 * tm * S * x_isz        # double-buffered input row tile
    o_buf = 2 * tm * S * o_isz        # double-buffered output row tile
    temps = 4 * tm * S * 4            # live f32 temporaries + slack
    return weight + params + x_buf + o_buf + temps


def _ksplit_vmem(tm, tk, S, x_isz, w_isz, o_isz):
    w_buf = 2 * tk * S * w_isz        # streamed weight slabs (double-buffered)
    xk_buf = 2 * tm * tk * x_isz      # streamed x K-chunks
    xf_buf = 2 * tm * S * x_isz       # full-row x for the residual
    params = 2 * 3 * S * 4
    o_buf = 2 * tm * S * o_isz
    acc = tm * S * 4                  # f32 accumulator scratch
    temps = 3 * tm * S * 4
    return w_buf + xk_buf + xf_buf + params + o_buf + acc + temps


def _pick_tm_single(B, S, x_isz, w_isz, o_isz, budget, num_cores):
    rows = max(8, _round_up(B, 8))
    fits = [min(t, rows) for t in _TM_CANDIDATES
            if _single_pass_vmem(min(t, rows), S, x_isz, w_isz, o_isz) <= budget]
    if not fits:
        return None                    # resident weight does not fit -> K-split
    if num_cores >= 2:
        # v7x: rows shard across 2 TCs -> prefer an even number of full steps.
        for t in fits:
            steps = -(-rows // t)
            if steps >= 2 and steps % 2 == 0 and rows % t == 0:
                return t
        for t in fits:
            if -(-rows // t) >= 2:
                return t
    # Single TensorCore: the grid is a serial loop -> take the biggest tile.
    return fits[0]


def _pick_tiles_ksplit(B, S, x_isz, w_isz, o_isz, budget, num_cores, tk_fixed=None):
    rows = max(8, _round_up(B, 8))
    if tk_fixed is not None:
        tks = (tk_fixed,)
    else:
        tks = tuple(t for t in _TK_CANDIDATES if t < S and S % t == 0) or (128,)
    want_steps = 2 if num_cores >= 2 else 1
    best = None
    for tm_c in _TM_CANDIDATES:
        tmc = min(tm_c, rows)
        for tkc in tks:
            if _ksplit_vmem(tmc, tkc, S, x_isz, w_isz, o_isz) <= budget:
                if best is None:
                    best = (tmc, tkc)
                if -(-rows // tmc) >= want_steps:
                    return tmc, tkc
    return best if best is not None else (8, tks[-1])


# --------------------------------------------------------------------------- #
# Public wrapper
# --------------------------------------------------------------------------- #
def block_forward(x, w_t, b, gamma, beta, *, tm=None, tk=None,
                  approximate_gelu=False, mxu_bf16=False):
    """LayerNorm(x + GELU(x @ w_t + b)).

    x:   [B, S] (f32 or bf16)
    w_t: [S, S] pre-transposed nn.Linear weight (x @ w_t == torch x @ W.T)
    b, gamma, beta: [S]
    tk (optional): force the K-split path with this reduction tile (must divide S).
    """
    B, S = x.shape
    out_dtype = x.dtype
    x_isz = jnp.dtype(x.dtype).itemsize
    w_isz = jnp.dtype(w_t.dtype).itemsize
    o_isz = jnp.dtype(out_dtype).itemsize

    vmem_cap, num_cores = _tpu_vmem_and_cores()
    budget = int(0.80 * vmem_cap)            # tile-picker budget
    vmem_ceiling = vmem_cap - (8 << 20)      # headroom for Mosaic internal scratch

    # Pack bias / gamma / beta into one small operand (single DMA).
    params = jnp.stack([b.astype(jnp.float32), gamma.astype(jnp.float32),
                        beta.astype(jnp.float32)], axis=0)

    use_ksplit = (tk is not None) and (tk < S)
    if not use_ksplit and tm is None:
        tm = _pick_tm_single(B, S, x_isz, w_isz, o_isz, budget, num_cores)
        if tm is None:
            if S % 128 == 0 and S > 128:
                use_ksplit = True            # stream the weight in (tk, S) slabs
            else:
                tm = 8  # TODO(synk): huge S not divisible by 128 - pad K on host instead.

    if use_ksplit:
        if tm is None or tk is None:
            tm_a, tk_a = _pick_tiles_ksplit(B, S, x_isz, w_isz, o_isz, budget,
                                            num_cores, tk_fixed=tk)
            tm = tm_a if tm is None else tm
            tk = tk_a if tk is None else tk
        assert S % tk == 0, "K-split requires tk to divide the feature size"
        est = _ksplit_vmem(tm, tk, S, x_isz, w_isz, o_isz)
    else:
        est = _single_pass_vmem(tm, S, x_isz, w_isz, o_isz)

    vmem_limit = max(32 << 20, int(1.25 * est) + (2 << 20))
    vmem_limit = int(min(vmem_limit, vmem_ceiling))

    grid_rows = pl.cdiv(B, tm)               # ragged last tile handled in-kernel

    if not use_ksplit:
        kernel = functools.partial(_block_kernel,
                                   approximate_gelu=approximate_gelu,
                                   mxu_bf16=mxu_bf16)
        return pl.pallas_call(
            kernel,
            out_shape=jax.ShapeDtypeStruct((B, S), out_dtype),
            grid_spec=pltpu.PrefetchScalarGridSpec(
                num_scalar_prefetch=0,
                grid=(grid_rows,),
                in_specs=[
                    pl.BlockSpec((tm, S), lambda i: (i, 0)),   # x row tile
                    pl.BlockSpec((S, S), lambda i: (0, 0)),    # resident weight
                    pl.BlockSpec((3, S), lambda i: (0, 0)),    # bias/gamma/beta
                ],
                out_specs=pl.BlockSpec((tm, S), lambda i: (i, 0)),
            ),
            compiler_params=pltpu.CompilerParams(
                dimension_semantics=("parallel",),
                vmem_limit_bytes=vmem_limit,
            ),
        )(x, w_t, params)

    # K-split path: weight streamed in (tk, S) slabs, f32 accumulator scratch,
    # bias/GELU/residual/LayerNorm applied only on the last K step.
    kernel = functools.partial(_block_ksplit_kernel,
                               approximate_gelu=approximate_gelu,
                               mxu_bf16=mxu_bf16)
    return pl.pallas_call(
        kernel,
        out_shape=jax.ShapeDtypeStruct((B, S), out_dtype),
        grid_spec=pltpu.PrefetchScalarGridSpec(
            num_scalar_prefetch=0,
            grid=(grid_rows, S // tk),
            in_specs=[
                pl.BlockSpec((tm, tk), lambda i, k: (i, k)),   # x K-chunk (matmul)
                pl.BlockSpec((tm, S), lambda i, k: (i, 0)),    # full-row x (residual)
                pl.BlockSpec((tk, S), lambda i, k: (k, 0)),    # weight K-slab
                pl.BlockSpec((3, S), lambda i, k: (0, 0)),     # bias/gamma/beta
            ],
            out_specs=pl.BlockSpec((tm, S), lambda i, k: (i, 0)),
            scratch_shapes=[pltpu.VMEM((tm, S), jnp.float32)],
        ),
        compiler_params=pltpu.CompilerParams(
            dimension_semantics=("parallel", "arbitrary"),
            vmem_limit_bytes=vmem_limit,
        ),
    )(x, x, w_t, params)


# --------------------------------------------------------------------------- #
# Pure-JAX reference
# --------------------------------------------------------------------------- #
def block_reference(x, w_t, b, gamma, beta, *, approximate_gelu=False):
    h = x.astype(jnp.float32) @ w_t.astype(jnp.float32) + b.astype(jnp.float32)
    g = jax.nn.gelu(h, approximate=approximate_gelu)
    r = x.astype(jnp.float32) + g
    mean = jnp.mean(r, axis=-1, keepdims=True)
    var = jnp.mean((r - mean) ** 2, axis=-1, keepdims=True)
    y = (r - mean) / jnp.sqrt(var + 1e-5)
    return (y * gamma.astype(jnp.float32) + beta.astype(jnp.float32)).astype(x.dtype)


if __name__ == "__main__":
    key = jax.random.PRNGKey(0)
    kx, kw, kb, kg, kbe, kx2 = jax.random.split(key, 6)

    def make_weights(size):
        w_t = jax.random.normal(kw, (size, size), dtype=jnp.float32) / jnp.sqrt(size)
        b = jax.random.normal(kb, (size,), dtype=jnp.float32) * 0.1
        gamma = 1.0 + 0.05 * jax.random.normal(kg, (size,), dtype=jnp.float32)
        beta = 0.05 * jax.random.normal(kbe, (size,), dtype=jnp.float32)
        return w_t, b, gamma, beta

    # 1) Main path: exact (erf) GELU, auto generation-aware tile selection.
    size, batch = 128, 256
    x = jax.random.normal(kx, (batch, size), dtype=jnp.float32)
    w_t, b, gamma, beta = make_weights(size)
    out = jax.block_until_ready(block_forward(x, w_t, b, gamma, beta))
    ref = block_reference(x, w_t, b, gamma, beta)
    assert out.shape == (batch, size)
    assert jnp.allclose(out, ref, atol=1e-4, rtol=1e-4), "mismatch (main path)"

    # 2) Ragged batch handled in-kernel (no host pad / output slice copies).
    xr = jax.random.normal(kx2, (200, size), dtype=jnp.float32)
    out_r = jax.block_until_ready(block_forward(xr, w_t, b, gamma, beta, tm=128))
    ref_r = block_reference(xr, w_t, b, gamma, beta)
    assert out_r.shape == (200, size)
    assert jnp.allclose(out_r, ref_r, atol=1e-4, rtol=1e-4), "mismatch (ragged rows)"

    # 3) Tanh-approximate GELU (EUP path), compared against the matching reference.
    out_t = jax.block_until_ready(
        block_forward(x, w_t, b, gamma, beta, approximate_gelu=True))
    ref_t = block_reference(x, w_t, b, gamma, beta, approximate_gelu=True)
    assert jnp.allclose(out_t, ref_t, atol=1e-4, rtol=1e-4), "mismatch (tanh GELU)"

    # 4) K-split path (streamed weight slabs, as used for large S on v7x), forced small.
    size2 = 256
    x2 = jax.random.normal(kx, (64, size2), dtype=jnp.float32)
    w2, b2, g2, be2 = make_weights(size2)
    out_k = jax.block_until_ready(block_forward(x2, w2, b2, g2, be2, tm=32, tk=128))
    ref_k = block_reference(x2, w2, b2, g2, be2)
    assert jnp.allclose(out_k, ref_k, atol=1e-4, rtol=1e-4), "mismatch (K-split)"

    # 5) bf16 MXU-operand path (looser tolerance by construction).
    out_b = jax.block_until_ready(
        block_forward(x, w_t, b, gamma, beta, mxu_bf16=True))
    assert jnp.allclose(out_b, ref, atol=5e-2, rtol=5e-2), "mismatch (bf16 MXU)"

    print("KERNEL_OK")
</pallas_src>

<mosaic_0001>
module attributes {stable_mosaic.version = 11 : i64} {
  func.func @_block_kernel(%arg0: i32, %arg1: memref<256x128xf32, #tpu.memory_space<vmem>>, %arg2: memref<128x128xf32, #tpu.memory_space<vmem>>, %arg3: memref<3x128xf32, #tpu.memory_space<vmem>>, %arg4: memref<256x128xf32, #tpu.memory_space<vmem>>) attributes {dimension_semantics = [#tpu.dimension_semantics<parallel>], iteration_bounds = array<i64: 1>, scalar_prefetch = 0 : i64, scratch_operands = 0 : i64, tpu.core_type = #tpu.core_type<tc>, window_params = [{transform_indices = @transform_0, window_bounds = array<i64: 256, 128>}, {pipeline_mode = #tpu.pipeline_mode<synchronous>, transform_indices = @transform_1, window_bounds = array<i64: 128, 128>}, {pipeline_mode = #tpu.pipeline_mode<synchronous>, transform_indices = @transform_2, window_bounds = array<i64: 3, 128>}, {transform_indices = @transform_3, window_bounds = array<i64: 256, 128>}]} {
    %c0 = arith.constant 0 : index
    %c0_0 = arith.constant 0 : index
    %0 = vector.load %arg1[%c0, %c0_0] : memref<256x128xf32, #tpu.memory_space<vmem>>, vector<256x128xf32>
    %c0_1 = arith.constant 0 : index
    %c0_2 = arith.constant 0 : index
    %1 = vector.load %arg2[%c0_1, %c0_2] : memref<128x128xf32, #tpu.memory_space<vmem>>, vector<128x128xf32>
    %cst = arith.constant dense<0.000000e+00> : vector<256x128xf32>
    %2 = tpu.matmul %0, %1, %cst {dimension_numbers = #tpu.dot_dimension_numbers<[1], [0], [0], [1], [0, 0, 1, 1], [], []>} : vector<256x128xf32>, vector<128x128xf32>, vector<256x128xf32> -> vector<256x128xf32>
    %c0_3 = arith.constant 0 : index
    %c0_4 = arith.constant 0 : index
    %3 = vector.load %arg3[%c0_3, %c0_4] : memref<3x128xf32, #tpu.memory_space<vmem>>, vector<1x128xf32>
    %4 = vector.broadcast %3 : vector<1x128xf32> to vector<256x128xf32>
    %5 = arith.addf %2, %4 : vector<256x128xf32>
    %cst_5 = arith.constant 5.000000e-01 : f32
    %6 = vector.broadcast %cst_5 : f32 to vector<256x128xf32>
    %7 = arith.mulf %6, %5 : vector<256x128xf32>
    %cst_6 = arith.constant 0.707106769 : f32
    %8 = vector.broadcast %cst_6 : f32 to vector<256x128xf32>
    %9 = arith.mulf %5, %8 : vector<256x128xf32>
    %10 = math.erf %9 : vector<256x128xf32>
    %cst_7 = arith.constant 1.000000e+00 : f32
    %11 = vector.broadcast %cst_7 : f32 to vector<256x128xf32>
    %12 = arith.addf %11, %10 : vector<256x128xf32>
    %13 = arith.mulf %7, %12 : vector<256x128xf32>
    %14 = arith.addf %0, %13 : vector<256x128xf32>
    %c1 = arith.constant 1 : index
    %c0_8 = arith.constant 0 : index
    %15 = vector.load %arg3[%c1, %c0_8] : memref<3x128xf32, #tpu.memory_space<vmem>>, vector<1x128xf32>
    %c2 = arith.constant 2 : index
    %c0_9 = arith.constant 0 : index
    %16 = vector.load %arg3[%c2, %c0_9] : memref<3x128xf32, #tpu.memory_space<vmem>>, vector<1x128xf32>
    %cst_10 = arith.constant dense<0.000000e+00> : vector<256xf32>
    %17 = vector.multi_reduction <add>, %14, %cst_10 [1] : vector<256x128xf32> to vector<256xf32>
    %18 = vector.shape_cast %17 : vector<256xf32> to vector<256x1xf32>
    %cst_11 = arith.constant 7.812500e-03 : f32
    %19 = vector.broadcast %cst_11 : f32 to vector<256x1xf32>
    %20 = arith.mulf %18, %19 : vector<256x1xf32>
    %21 = vector.broadcast %20 : vector<256x1xf32> to vector<256x128xf32>
    %22 = arith.subf %14, %21 : vector<256x128xf32>
    %23 = arith.mulf %22, %22 : vector<256x128xf32>
    %cst_12 = arith.constant dense<0.000000e+00> : vector<256xf32>
    %24 = vector.multi_reduction <add>, %23, %cst_12 [1] : vector<256x128xf32> to vector<256xf32>
    %25 = vector.shape_cast %24 : vector<256xf32> to vector<256x1xf32>
    %cst_13 = arith.constant 7.812500e-03 : f32
    %26 = vector.broadcast %cst_13 : f32 to vector<256x1xf32>
    %27 = arith.mulf %25, %26 : vector<256x1xf32>
    %cst_14 = arith.constant 9.99999974E-6 : f32
    %28 = vector.broadcast %cst_14 : f32 to vector<256x1xf32>
    %29 = arith.addf %27, %28 : vector<256x1xf32>
    %30 = math.rsqrt %29 : vector<256x1xf32>
    %31 = vector.broadcast %30 : vector<256x1xf32> to vector<256x128xf32>
    %32 = arith.mulf %22, %31 : vector<256x128xf32>
    %33 = vector.broadcast %15 : vector<1x128xf32> to vector<256x128xf32>
    %34 = arith.mulf %32, %33 : vector<256x128xf32>
    %35 = vector.broadcast %16 : vector<1x128xf32> to vector<256x128xf32>
    %36 = arith.addf %34, %35 : vector<256x128xf32>
    %c0_15 = arith.constant 0 : index
    %c0_16 = arith.constant 0 : index
    %37 = vector.load %arg4[%c0_15, %c0_16] : memref<256x128xf32, #tpu.memory_space<vmem>>, vector<256x128xf32>
    tpu.vector_store %arg4[%c0_15, %c0_16], %36 {strides = array<i32>} : memref<256x128xf32, #tpu.memory_space<vmem>>, vector<256x128xf32>,
    return
  }
  func.func @transform_0(%arg0: i32) -> (i32, i32) {
    %c0_i32 = arith.constant 0 : i32
    %c0_i32_0 = arith.constant 0 : i32
    return %arg0, %c0_i32 : i32, i32
  }
  func.func @transform_1(%arg0: i32) -> (i32, i32) {
    %c0_i32 = arith.constant 0 : i32
    %c0_i32_0 = arith.constant 0 : i32
    %c0_i32_1 = arith.constant 0 : i32
    return %c0_i32, %c0_i32_0 : i32, i32
  }
  func.func @transform_2(%arg0: i32) -> (i32, i32) {
    %c0_i32 = arith.constant 0 : i32
    %c0_i32_0 = arith.constant 0 : i32
    %c0_i32_1 = arith.constant 0 : i32
    return %c0_i32, %c0_i32_0 : i32, i32
  }
  func.func @transform_3(%arg0: i32) -> (i32, i32) {
    %c0_i32 = arith.constant 0 : i32
    %c0_i32_0 = arith.constant 0 : i32
    return %arg0, %c0_i32 : i32, i32
  }
}

</mosaic_0001>

<llo_original>
// kernel: tpu_custom_call.1
$region0: #{tpu_custom_call.1}
  #allocation0 [shape = 'u32[]', space=smem, size = 0x4, offset = 0x4, fixed_abs, tag = 'smem constant byte address 0x4 - core index']
  #allocation1 [shape = 'u32[144,128]{1,0:T(1,128)}', space=vmem, size = 0x12000, scoped, tag = 'internal scratch']
  %s0 = inlined_call_operand.hbm [shape: f32[256,128], index: 0, kind: input, shape index: {}]
  %s1 = inlined_call_operand.hbm [shape: f32[128,128], index: 1, kind: input, shape index: {}]
  %s2 = inlined_call_operand.vmem [shape: f32[3,128], index: 2, kind: input, shape index: {}]
  %s3 = inlined_call_operand.hbm [shape: f32[256,128], index: 3, kind: output, shape index: {}]
  %s4 = sld [smem:[#allocation0]]
  $region30: #{tpu_custom_call.1} parent=0
    _
  %s6 = ssub.s32 1, %s4
  %s7 = scalar_select 0, %s6, %s4
  $region1: #{tpu_custom_call.1} parent=0
    #allocation2 [shape = 'u8[131072]{0}', space=vmem, size = 0x20000, scoped, tag = 'input window, operand 0, single buffered']
    #allocation3 [shape = 's32[1]{0}', space=sflag, size = 0x4, scoped, tag = 'scoped memory for tpu_custom_call.1']
    #allocation4 [shape = 's32[1]{0}', space=sflag, size = 0x4, scoped, tag = 'scoped memory for tpu_custom_call.1']
    #allocation5 [shape = 'u8[65536]{0}', space=vmem, size = 0x10000, scoped, tag = 'input window, operand 1, single buffered']
    #allocation6 [shape = 's32[1]{0}', space=sflag, size = 0x4, scoped, tag = 'scoped memory for tpu_custom_call.1']
    #allocation7 [shape = 'u8[131072]{0}', space=vmem, size = 0x20000, scoped, tag = 'output window, operand 0, single buffered']
    %8 = vsyncpa [#allocation3], 0
    %9 = vsyncpa [#allocation6], 0
    %10 = vsyncpa [#allocation4], 0
    // Predicated region
    $region2: #{tpu_custom_call.1} parent=1 // pred_check
      _
    $region3: #{tpu_custom_call.1} parent=1 // pred_check_branch
      %12 = sbr.rel (0) target = $region5
    $region4: #{tpu_custom_call.1} parent=1 // pred_region
      %s14 = ssub.s32 4096, 4096
      %15 = vsyncadd [#allocation3], %s14
      %s16 = sshll.u32 [#allocation2], 4
      %s17 = int_to_ptr.vmem [resolvable:$true] %s16
      %22 = dma.hbm_to_vmem [thread:$0]  %s0, 4096, %s17, [#allocation3], 128, 128, 8
    $region5: #{tpu_custom_call.1} parent=1 // pred_fallthru
      _
    // Predicated region
    $region6: #{tpu_custom_call.1} parent=1 // pred_check
      _
    $region7: #{tpu_custom_call.1} parent=1 // pred_check_branch
      %24 = sbr.rel (0) target = $region9
    $region8: #{tpu_custom_call.1} parent=1 // pred_region
      %s26 = ssub.s32 2048, 2048
      %27 = vsyncadd [#allocation6], %s26
      %s28 = sshll.u32 [#allocation5], 4
      %s29 = int_to_ptr.vmem [resolvable:$true] %s28
      %34 = dma.hbm_to_vmem [thread:$0]  %s1, 2048, %s29, [#allocation6], 128, 128, 8
    $region9: #{tpu_custom_call.1} parent=1 // pred_fallthru
      _
    // Predicated region
    $region10: #{tpu_custom_call.1} parent=1 // pred_check
      _
    $region11: #{tpu_custom_call.1} parent=1 // pred_check_branch
      %36 = sbr.rel (0) target = $region13
    $region12: #{tpu_custom_call.1} parent=1 // pred_region
      _
    $region13: #{tpu_custom_call.1} parent=1 // pred_fallthru
      _
    // Predicated region
    $region14: #{tpu_custom_call.1} parent=1 // pred_check
      _
    $region15: #{tpu_custom_call.1} parent=1 // pred_check_branch
      %38 = sbr.rel (0) target = $region17
    $region16: #{tpu_custom_call.1} parent=1 // pred_region
      %39 = dma.done [#allocation3], 4096
    $region17: #{tpu_custom_call.1} parent=1 // pred_fallthru
      _
    // Predicated region
    $region18: #{tpu_custom_call.1} parent=1 // pred_check
      _
    $region19: #{tpu_custom_call.1} parent=1 // pred_check_branch
      %41 = sbr.rel (0) target = $region21
    $region20: #{tpu_custom_call.1} parent=1 // pred_region
      %42 = dma.done [#allocation6], 2048
    $region21: #{tpu_custom_call.1} parent=1 // pred_fallthru
      _
    %v43 = vld [vmem:[#allocation2] sm:$0xff]
    %v44 = vld [vmem:[#allocation2 + $0x8] sm:$0xff]
    %v45 = vld [vmem:[#allocation2 + $0x10] sm:$0xff]
    %v46 = vld [vmem:[#allocation2 + $0x18] sm:$0xff]
    %v47 = vld [vmem:[#allocation2 + $0x20] sm:$0xff]
    %v48 = vld [vmem:[#allocation2 + $0x28] sm:$0xff]
    %v49 = vld [vmem:[#allocation2 + $0x30] sm:$0xff]
    %v50 = vld [vmem:[#allocation2 + $0x38] sm:$0xff]
    %v51 = vld [vmem:[#allocation2 + $0x40] sm:$0xff]
    %v52 = vld [vmem:[#allocation2 + $0x48] sm:$0xff]
    %v53 = vld [vmem:[#allocation2 + $0x50] sm:$0xff]
    %v54 = vld [vmem:[#allocation2 + $0x58] sm:$0xff]
    %v55 = vld [vmem:[#allocation2 + $0x60] sm:$0xff]
    %v56 = vld [vmem:[#allocation2 + $0x68] sm:$0xff]
    %v57 = vld [vmem:[#allocation2 + $0x70] sm:$0xff]
    %v58 = vld [vmem:[#allocation2 + $0x78] sm:$0xff]
    %v59 = vld [vmem:[#allocation2 + $0x80] sm:$0xff]
    %v60 = vld [vmem:[#allocation2 + $0x88] sm:$0xff]
    %v61 = vld [vmem:[#allocation2 + $0x90] sm:$0xff]
    %v62 = vld [vmem:[#allocation2 + $0x98] sm:$0xff]
    %v63 = vld [vmem:[#allocation2 + $0xa0] sm:$0xff]
    %v64 = vld [vmem:[#allocation2 + $0xa8] sm:$0xff]
    %v65 = vld [vmem:[#allocation2 + $0xb0] sm:$0xff]
    %v66 = vld [vmem:[#allocation2 + $0xb8] sm:$0xff]
    %v67 = vld [vmem:[#allocation2 + $0xc0] sm:$0xff]
    %v68 = vld [vmem:[#allocation2 + $0xc8] sm:$0xff]
    %v69 = vld [vmem:[#allocation2 + $0xd0] sm:$0xff]
    %v70 = vld [vmem:[#allocation2 + $0xd8] sm:$0xff]
    %v71 = vld [vmem:[#allocation2 + $0xe0] sm:$0xff]
    %v72 = vld [vmem:[#allocation2 + $0xe8] sm:$0xff]
    %v73 = vld [vmem:[#allocation2 + $0xf0] sm:$0xff]
    %v74 = vld [vmem:[#allocation2 + $0xf8] sm:$0xff]
    %v75 = vld [vmem:[#allocation5] sm:$0xff]
    %v76 = vld [vmem:[#allocation5 + $0x8] sm:$0xff]
    %v77 = vld [vmem:[#allocation5 + $0x10] sm:$0xff]
    %v78 = vld [vmem:[#allocation5 + $0x18] sm:$0xff]
    %v79 = vld [vmem:[#allocation5 + $0x20] sm:$0xff]
    %v80 = vld [vmem:[#allocation5 + $0x28] sm:$0xff]
    %v81 = vld [vmem:[#allocation5 + $0x30] sm:$0xff]
    %v82 = vld [vmem:[#allocation5 + $0x38] sm:$0xff]
    %v83 = vld [vmem:[#allocation5 + $0x40] sm:$0xff]
    %v84 = vld [vmem:[#allocation5 + $0x48] sm:$0xff]
    %v85 = vld [vmem:[#allocation5 + $0x50] sm:$0xff]
    %v86 = vld [vmem:[#allocation5 + $0x58] sm:$0xff]
    %v87 = vld [vmem:[#allocation5 + $0x60] sm:$0xff]
    %v88 = vld [vmem:[#allocation5 + $0x68] sm:$0xff]
    %v89 = vld [vmem:[#allocation5 + $0x70] sm:$0xff]
    %v90 = vld [vmem:[#allocation5 + $0x78] sm:$0xff]
    %v91 = vld [vmem:[%s2] sm:$0x1]
    %v92 = vlaneseq
    %v93 = vshrl.u32 %v92, 7
    %v94 = vsub.s32 0, %v93
    %v95 = vrot.slane %v91, %v94
    %96 = vmatprep.subr.mxu0 0.0
    %97 = vmatpush1.msra.mxu0 %v75
    %98 = vmatprep.subr.mxu0 0.0
    %99 = vmatpush1.msra.mxu0 %v76
    %100 = vmatprep.subr.mxu0 0.0
    %101 = vmatpush1.msra.mxu0 %v77
    %102 = vmatprep.subr.mxu0 0.0
    %103 = vmatpush1.msra.mxu0 %v78
    %104 = vmatprep.subr.mxu0 0.0
    %105 = vmatpush1.msra.mxu0 %v79
    %106 = vmatprep.subr.mxu0 0.0
    %107 = vmatpush1.msra.mxu0 %v80
    %108 = vmatprep.subr.mxu0 0.0
    %109 = vmatpush1.msra.mxu0 %v81
    %110 = vmatprep.subr.mxu0 0.0
    %111 = vmatpush1.msra.mxu0 %v82
    %112 = vmatprep.subr.mxu0 0.0
    %113 = vmatpush1.msra.mxu0 %v83
    %114 = vmatprep.subr.mxu0 0.0
    %115 = vmatpush1.msra.mxu0 %v84
    %116 = vmatprep.subr.mxu0 0.0
    %117 = vmatpush1.msra.mxu0 %v85
    %118 = vmatprep.subr.mxu0 0.0
    %119 = vmatpush1.msra.mxu0 %v86
    %120 = vmatprep.subr.mxu0 0.0
    %121 = vmatpush1.msra.mxu0 %v87
    %122 = vmatprep.subr.mxu0 0.0
    %123 = vmatpush1.msra.mxu0 %v88
    %124 = vmatprep.subr.mxu0 0.0
    %125 = vmatpush1.msra.mxu0 %v89
    %126 = vmatprep.subr.mxu0 0.0
    %127 = vmatpush1.msra.mxu0 %v90
    %128 = vmatprep.subr.mxu0 0.0
    %129 = vmatpush1.msra.mxu0 0.0
    %130 = vmatprep.subr.mxu0 0.0
    %131 = vmatpush1.msra.mxu0 0.0
    %132 = vmatprep.subr.mxu0 0.0
    %133 = vmatpush1.msra.mxu0 0.0
    %134 = vmatprep.subr.mxu0 0.0
    %135 = vmatpush1.msra.mxu0 0.0
    %136 = vmatprep.subr.mxu0 0.0
    %137 = vmatpush1.msra.mxu0 0.0
    %138 = vmatprep.subr.mxu0 0.0
    %139 = vmatpush1.msra.mxu0 0.0
    %140 = vmatprep.subr.mxu0 0.0
    %141 = vmatpush1.msra.mxu0 0.0
    %142 = vmatprep.subr.mxu0 0.0
    %143 = vmatpush1.msra.mxu0 0.0
    %144 = vmatprep.subr.mxu0 0.0
    %145 = vmatpush1.msra.mxu0 0.0
    %146 = vmatprep.subr.mxu0 0.0
    %147 = vmatpush1.msra.mxu0 0.0
    %148 = vmatprep.subr.mxu0 0.0
    %149 = vmatpush1.msra.mxu0 0.0
    %150 = vmatprep.subr.mxu0 0.0
    %151 = vmatpush1.msra.mxu0 0.0
    %152 = vmatprep.subr.mxu0 0.0
    %153 = vmatpush1.msra.mxu0 0.0
    %154 = vmatprep.subr.mxu0 0.0
    %155 = vmatpush1.msra.mxu0 0.0
    %156 = vmatprep.subr.mxu0 0.0
    %157 = vmatpush1.msra.mxu0 0.0
    %158 = vmatprep.subr.mxu0 0.0
    %159 = vmatpush1.msra.mxu0 0.0
    %160 = vmatprep.mubr.f32.mxu0 0.0
    %161 = vmatmul.mubr.f32.gmra.mrb[0].mxu0 %v43
    %v162 = vpop.f32.mrb[0].mxu0
    %v163 = vadd.f32 %v95, %v162
    %v164 = vpop.f32.mrb[0].mxu0
    %165 = vmatprep.mubr.f32.mxu0 0.0
    %166 = vmatmul.mubr.f32.gmra.mrb[0].mxu0 %v44
    %v167 = vpop.f32.mrb[0].mxu0
    %v168 = vadd.f32 %v95, %v167
    %v169 = vpop.f32.mrb[0].mxu0
    %170 = vmatprep.mubr.f32.mxu0 0.0
    %171 = vmatmul.mubr.f32.gmra.mrb[0].mxu0 %v45
    %v172 = vpop.f32.mrb[0].mxu0
    %v173 = vadd.f32 %v95, %v172
    %v174 = vpop.f32.mrb[0].mxu0
    %175 = vmatprep.mubr.f32.mxu0 0.0
    %176 = vmatmul.mubr.f32.gmra.mrb[0].mxu0 %v46
    %v177 = vpop.f32.mrb[0].mxu0
    %v178 = vadd.f32 %v95, %v177
    %v179 = vpop.f32.mrb[0].mxu0
    %180 = vmatprep.mubr.f32.mxu0 0.0
    %181 = vmatmul.mubr.f32.gmra.mrb[0].mxu0 %v47
    %v182 = vpop.f32.mrb[0].mxu0
    %v183 = vadd.f32 %v95, %v182
    %v184 = vpop.f32.mrb[0].mxu0
    %185 = vmatprep.mubr.f32.mxu0 0.0
    %186 = vmatmul.mubr.f32.gmra.mrb[0].mxu0 %v48
    %v187 = vpop.f32.mrb[0].mxu0
    %v188 = vadd.f32 %v95, %v187
    %v189 = vpop.f32.mrb[0].mxu0
    %190 = vmatprep.mubr.f32.mxu0 0.0
    %191 = vmatmul.mubr.f32.gmra.mrb[0].mxu0 %v49
    %v192 = vpop.f32.mrb[0].mxu0
    %v193 = vadd.f32 %v95, %v192
    %v194 = vpop.f32.mrb[0].mxu0
    %195 = vmatprep.mubr.f32.mxu0 0.0
    %196 = vmatmul.mubr.f32.gmra.mrb[0].mxu0 %v50
    %v197 = vpop.f32.mrb[0].mxu0
    %v198 = vadd.f32 %v95, %v197
    %v199 = vpop.f32.mrb[0].mxu0
    %200 = vmatprep.mubr.f32.mxu0 0.0
    %201 = vmatmul.mubr.f32.gmra.mrb[0].mxu0 %v51
    %v202 = vpop.f32.mrb[0].mxu0
    %v203 = vadd.f32 %v95, %v202
    %v204 = vpop.f32.mrb[0].mxu0
    %205 = vmatprep.mubr.f32.mxu0 0.0
    %206 = vmatmul.mubr.f32.gmra.mrb[0].mxu0 %v52
    %v207 = vpop.f32.mrb[0].mxu0
    %v208 = vadd.f32 %v95, %v207
    %v209 = vpop.f32.mrb[0].mxu0
    %210 = vmatprep.mubr.f32.mxu0 0.0
    %211 = vmatmul.mubr.f32.gmra.mrb[0].mxu0 %v53
    %v212 = vpop.f32.mrb[0].mxu0
    %v213 = vadd.f32 %v95, %v212
    %v214 = vpop.f32.mrb[0].mxu0
    %215 = vmatprep.mubr.f32.mxu0 0.0
    %216 = vmatmul.mubr.f32.gmra.mrb[0].mxu0 %v54
    %v217 = vpop.f32.mrb[0].mxu0
    %v218 = vadd.f32 %v95, %v217
    %v219 = vpop.f32.mrb[0].mxu0
    %220 = vmatprep.mubr.f32.mxu0 0.0
    %221 = vmatmul.mubr.f32.gmra.mrb[0].mxu0 %v55
    %v222 = vpop.f32.mrb[0].mxu0
    %v223 = vadd.f32 %v95, %v222
    %v224 = vpop.f32.mrb[0].mxu0
    %225 = vmatprep.mubr.f32.mxu0 0.0
    %226 = vmatmul.mubr.f32.gmra.mrb[0].mxu0 %v56
    %v227 = vpop.f32.mrb[0].mxu0
    %v228 = vadd.f32 %v95, %v227
    %v229 = vpop.f32.mrb[0].mxu0
    %230 = vmatprep.mubr.f32.mxu0 0.0
    %231 = vmatmul.mubr.f32.gmra.mrb[0].mxu0 %v57
    %v232 = vpop.f32.mrb[0].mxu0
    %v233 = vadd.f32 %v95, %v232
    %v234 = vpop.f32.mrb[0].mxu0
    %235 = vmatprep.mubr.f32.mxu0 0.0
    %236 = vmatmul.mubr.f32.gmra.mrb[0].mxu0 %v58
    %v237 = vpop.f32.mrb[0].mxu0
    %v238 = vadd.f32 %v95, %v237
    %v239 = vpop.f32.mrb[0].mxu0
    %240 = vmatprep.mubr.f32.mxu0 0.0
    %241 = vmatmul.mubr.f32.gmra.mrb[0].mxu0 %v59
    %v242 = vpop.f32.mrb[0].mxu0
    %v243 = vadd.f32 %v95, %v242
    %v244 = vpop.f32.mrb[0].mxu0
    %245 = vmatprep.mubr.f32.mxu0 0.0
    %246 = vmatmul.mubr.f32.gmra.mrb[0].mxu0 %v60
    %v247 = vpop.f32.mrb[0].mxu0
    %v248 = vadd.f32 %v95, %v247
    %v249 = vpop.f32.mrb[0].mxu0
    %250 = vmatprep.mubr.f32.mxu0 0.0
    %251 = vmatmul.mubr.f32.gmra.mrb[0].mxu0 %v61
    %v252 = vpop.f32.mrb[0].mxu0
    %v253 = vadd.f32 %v95, %v252
    %v254 = vpop.f32.mrb[0].mxu0
    %255 = vmatprep.mubr.f32.mxu0 0.0
    %256 = vmatmul.mubr.f32.gmra.mrb[0].mxu0 %v62
    %v257 = vpop.f32.mrb[0].mxu0
    %v258 = vadd.f32 %v95, %v257
    %v259 = vpop.f32.mrb[0].mxu0
    %260 = vmatprep.mubr.f32.mxu0 0.0
    %261 = vmatmul.mubr.f32.gmra.mrb[0].mxu0 %v63
    %v262 = vpop.f32.mrb[0].mxu0
    %v263 = vadd.f32 %v95, %v262
    %v264 = vpop.f32.mrb[0].mxu0
    %265 = vmatprep.mubr.f32.mxu0 0.0
    %266 = vmatmul.mubr.f32.gmra.mrb[0].mxu0 %v64
    %v267 = vpop.f32.mrb[0].mxu0
    %v268 = vadd.f32 %v95, %v267
    %v269 = vpop.f32.mrb[0].mxu0
    %270 = vmatprep.mubr.f32.mxu0 0.0
    %271 = vmatmul.mubr.f32.gmra.mrb[0].mxu0 %v65
    %v272 = vpop.f32.mrb[0].mxu0
    %v273 = vadd.f32 %v95, %v272
    %v274 = vpop.f32.mrb[0].mxu0
    %275 = vmatprep.mubr.f32.mxu0 0.0
    %276 = vmatmul.mubr.f32.gmra.mrb[0].mxu0 %v66
    %v277 = vpop.f32.mrb[0].mxu0
    %v278 = vadd.f32 %v95, %v277
    %v279 = vpop.f32.mrb[0].mxu0
    %280 = vmatprep.mubr.f32.mxu0 0.0
    %281 = vmatmul.mubr.f32.gmra.mrb[0].mxu0 %v67
    %v282 = vpop.f32.mrb[0].mxu0
    %v283 = vadd.f32 %v95, %v282
    %v284 = vpop.f32.mrb[0].mxu0
    %285 = vmatprep.mubr.f32.mxu0 0.0
    %286 = vmatmul.mubr.f32.gmra.mrb[0].mxu0 %v68
    %v287 = vpop.f32.mrb[0].mxu0
    %v288 = vadd.f32 %v95, %v287
    %v289 = vpop.f32.mrb[0].mxu0
    %290 = vmatprep.mubr.f32.mxu0 0.0
    %291 = vmatmul.mubr.f32.gmra.mrb[0].mxu0 %v69
    %v292 = vpop.f32.mrb[0].mxu0
    %v293 = vadd.f32 %v95, %v292
    %v294 = vpop.f32.mrb[0].mxu0
    %295 = vmatprep.mubr.f32.mxu0 0.0
    %296 = vmatmul.mubr.f32.gmra.mrb[0].mxu0 %v70
    %v297 = vpop.f32.mrb[0].mxu0
    %v298 = vadd.f32 %v95, %v297
    %v299 = vpop.f32.mrb[0].mxu0
    %300 = vmatprep.mubr.f32.mxu0 0.0
    %301 = vmatmul.mubr.f32.gmra.mrb[0].mxu0 %v71
    %v302 = vpop.f32.mrb[0].mxu0
    %v303 = vadd.f32 %v95, %v302
    %v304 = vpop.f32.mrb[0].mxu0
    %305 = vmatprep.mubr.f32.mxu0 0.0
    %306 = vmatmul.mubr.f32.gmra.mrb[0].mxu0 %v72
    %v307 = vpop.f32.mrb[0].mxu0
    %v308 = vadd.f32 %v95, %v307
    %v309 = vpop.f32.mrb[0].mxu0
    %310 = vmatprep.mubr.f32.mxu0 0.0
    %311 = vmatmul.mubr.f32.gmra.mrb[0].mxu0 %v73
    %v312 = vpop.f32.mrb[0].mxu0
    %v313 = vadd.f32 %v95, %v312
    %v314 = vpop.f32.mrb[0].mxu0
    %315 = vmatprep.mubr.f32.mxu0 0.0
    %316 = vmatmul.mubr.f32.gmra.mrb[0].mxu0 %v74
    %v317 = vpop.f32.mrb[0].mxu0
    %v318 = vadd.f32 %v95, %v317
    %v319 = vpop.f32.mrb[0].mxu0
    %320 = vdwg.mxu0
    %v321 = vmul.f32 %v163, 0.5
    %v322 = vmul.f32 %v168, 0.5
    %v323 = vmul.f32 %v173, 0.5
    %v324 = vmul.f32 %v178, 0.5
    %v325 = vmul.f32 %v183, 0.5
    %v326 = vmul.f32 %v188, 0.5
    %v327 = vmul.f32 %v193, 0.5
    %v328 = vmul.f32 %v198, 0.5
    %v329 = vmul.f32 %v203, 0.5
    %v330 = vmul.f32 %v208, 0.5
    %v331 = vmul.f32 %v213, 0.5
    %v332 = vmul.f32 %v218, 0.5
    %v333 = vmul.f32 %v223, 0.5
    %v334 = vmul.f32 %v228, 0.5
    %v335 = vmul.f32 %v233, 0.5
    %v336 = vmul.f32 %v238, 0.5
    %v337 = vmul.f32 %v243, 0.5
    %v338 = vmul.f32 %v248, 0.5
    %v339 = vmul.f32 %v253, 0.5
    %v340 = vmul.f32 %v258, 0.5
    %v341 = vmul.f32 %v263, 0.5
    %v342 = vmul.f32 %v268, 0.5
    %v343 = vmul.f32 %v273, 0.5
    %v344 = vmul.f32 %v278, 0.5
    %v345 = vmul.f32 %v283, 0.5
    %v346 = vmul.f32 %v288, 0.5
    %v347 = vmul.f32 %v293, 0.5
    %v348 = vmul.f32 %v298, 0.5
    %v349 = vmul.f32 %v303, 0.5
    %v350 = vmul.f32 %v308, 0.5
    %v351 = vmul.f32 %v313, 0.5
    %v352 = vmul.f32 %v318, 0.5
    %v353 = vmul.f32 %v163, 0.70710677
    %v354 = vmul.f32 %v168, 0.70710677
    %v355 = vmul.f32 %v173, 0.70710677
    %v356 = vmul.f32 %v178, 0.70710677
    %v357 = vmul.f32 %v183, 0.70710677
    %v358 = vmul.f32 %v188, 0.70710677
    %v359 = vmul.f32 %v193, 0.70710677
    %v360 = vmul.f32 %v198, 0.70710677
    %v361 = vmul.f32 %v203, 0.70710677
    %v362 = vmul.f32 %v208, 0.70710677
    %v363 = vmul.f32 %v213, 0.70710677
    %v364 = vmul.f32 %v218, 0.70710677
    %v365 = vmul.f32 %v223, 0.70710677
    %v366 = vmul.f32 %v228, 0.70710677
    %v367 = vmul.f32 %v233, 0.70710677
    %v368 = vmul.f32 %v238, 0.70710677
    %v369 = vmul.f32 %v243, 0.70710677
    %v370 = vmul.f32 %v248, 0.70710677
    %v371 = vmul.f32 %v253, 0.70710677
    %v372 = vmul.f32 %v258, 0.70710677
    %v373 = vmul.f32 %v263, 0.70710677
    %v374 = vmul.f32 %v268, 0.70710677
    %v375 = vmul.f32 %v273, 0.70710677
    %v376 = vmul.f32 %v278, 0.70710677
    %v377 = vmul.f32 %v283, 0.70710677
    %v378 = vmul.f32 %v288, 0.70710677
    %v379 = vmul.f32 %v293, 0.70710677
    %v380 = vmul.f32 %v298, 0.70710677
    %v381 = vmul.f32 %v303, 0.70710677
    %v382 = vmul.f32 %v308, 0.70710677
    %v383 = vmul.f32 %v313, 0.70710677
    %v384 = vmul.f32 %v318, 0.70710677
    %v385 = verf.f32.pop %v353
    %v386 = verf.f32.pop %v354
    %v387 = verf.f32.pop %v355
    %v388 = verf.f32.pop %v356
    %v389 = verf.f32.pop %v357
    %v390 = verf.f32.pop %v358
    %v391 = verf.f32.pop %v359
    %v392 = verf.f32.pop %v360
    %v393 = verf.f32.pop %v361
    %v394 = verf.f32.pop %v362
    %v395 = verf.f32.pop %v363
    %v396 = verf.f32.pop %v364
    %v397 = verf.f32.pop %v365
    %v398 = verf.f32.pop %v366
    %v399 = verf.f32.pop %v367
    %v400 = verf.f32.pop %v368
    %v401 = verf.f32.pop %v369
    %v402 = verf.f32.pop %v370
    %v403 = verf.f32.pop %v371
    %v404 = verf.f32.pop %v372
    %v405 = verf.f32.pop %v373
    %v406 = verf.f32.pop %v374
    %v407 = verf.f32.pop %v375
    %v408 = verf.f32.pop %v376
    %v409 = verf.f32.pop %v377
    %v410 = verf.f32.pop %v378
    %v411 = verf.f32.pop %v379
    %v412 = verf.f32.pop %v380
    %v413 = verf.f32.pop %v381
    %v414 = verf.f32.pop %v382
    %v415 = verf.f32.pop %v383
    %v416 = verf.f32.pop %v384
    %v417 = vadd.f32 %v385, 1.0
    %v418 = vadd.f32 %v386, 1.0
    %v419 = vadd.f32 %v387, 1.0
    %v420 = vadd.f32 %v388, 1.0
    %v421 = vadd.f32 %v389, 1.0
    %v422 = vadd.f32 %v390, 1.0
    %v423 = vadd.f32 %v391, 1.0
    %v424 = vadd.f32 %v392, 1.0
    %v425 = vadd.f32 %v393, 1.0
    %v426 = vadd.f32 %v394, 1.0
    %v427 = vadd.f32 %v395, 1.0
    %v428 = vadd.f32 %v396, 1.0
    %v429 = vadd.f32 %v397, 1.0
    %v430 = vadd.f32 %v398, 1.0
    %v431 = vadd.f32 %v399, 1.0
    %v432 = vadd.f32 %v400, 1.0
    %v433 = vadd.f32 %v401, 1.0
    %v434 = vadd.f32 %v402, 1.0
    %v435 = vadd.f32 %v403, 1.0
    %v436 = vadd.f32 %v404, 1.0
    %v437 = vadd.f32 %v405, 1.0
    %v438 = vadd.f32 %v406, 1.0
    %v439 = vadd.f32 %v407, 1.0
    %v440 = vadd.f32 %v408, 1.0
    %v441 = vadd.f32 %v409, 1.0
    %v442 = vadd.f32 %v410, 1.0
    %v443 = vadd.f32 %v411, 1.0
    %v444 = vadd.f32 %v412, 1.0
    %v445 = vadd.f32 %v413, 1.0
    %v446 = vadd.f32 %v414, 1.0
    %v447 = vadd.f32 %v415, 1.0
    %v448 = vadd.f32 %v416, 1.0
    %v449 = vmul.f32 %v321, %v417
    %v450 = vmul.f32 %v322, %v418
    %v451 = vmul.f32 %v323, %v419
    %v452 = vmul.f32 %v324, %v420
    %v453 = vmul.f32 %v325, %v421
    %v454 = vmul.f32 %v326, %v422
    %v455 = vmul.f32 %v327, %v423
    %v456 = vmul.f32 %v328, %v424
    %v457 = vmul.f32 %v329, %v425
    %v458 = vmul.f32 %v330, %v426
    %v459 = vmul.f32 %v331, %v427
    %v460 = vmul.f32 %v332, %v428
    %v461 = vmul.f32 %v333, %v429
    %v462 = vmul.f32 %v334, %v430
    %v463 = vmul.f32 %v335, %v431
    %v464 = vmul.f32 %v336, %v432
    %v465 = vmul.f32 %v337, %v433
    %v466 = vmul.f32 %v338, %v434
    %v467 = vmul.f32 %v339, %v435
    %v468 = vmul.f32 %v340, %v436
    %v469 = vmul.f32 %v341, %v437
    %v470 = vmul.f32 %v342, %v438
    %v471 = vmul.f32 %v343, %v439
    %v472 = vmul.f32 %v344, %v440
    %v473 = vmul.f32 %v345, %v441
    %v474 = vmul.f32 %v346, %v442
    %v475 = vmul.f32 %v347, %v443
    %v476 = vmul.f32 %v348, %v444
    %v477 = vmul.f32 %v349, %v445
    %v478 = vmul.f32 %v350, %v446
    %v479 = vmul.f32 %v351, %v447
    %v480 = vmul.f32 %v352, %v448
    %v481 = vadd.f32 %v43, %v449
    %v482 = vadd.f32 %v44, %v450
    %v483 = vadd.f32 %v45, %v451
    %v484 = vadd.f32 %v46, %v452
    %v485 = vadd.f32 %v47, %v453
    %v486 = vadd.f32 %v48, %v454
    %v487 = vadd.f32 %v49, %v455
    %v488 = vadd.f32 %v50, %v456
    %v489 = vadd.f32 %v51, %v457
    %v490 = vadd.f32 %v52, %v458
    %v491 = vadd.f32 %v53, %v459
    %v492 = vadd.f32 %v54, %v460
    %v493 = vadd.f32 %v55, %v461
    %v494 = vadd.f32 %v56, %v462
    %v495 = vadd.f32 %v57, %v463
    %v496 = vadd.f32 %v58, %v464
    %v497 = vadd.f32 %v59, %v465
    %v498 = vadd.f32 %v60, %v466
    %v499 = vadd.f32 %v61, %v467
    %v500 = vadd.f32 %v62, %v468
    %v501 = vadd.f32 %v63, %v469
    %v502 = vadd.f32 %v64, %v470
    %v503 = vadd.f32 %v65, %v471
    %v504 = vadd.f32 %v66, %v472
    %v505 = vadd.f32 %v67, %v473
    %v506 = vadd.f32 %v68, %v474
    %v507 = vadd.f32 %v69, %v475
    %v508 = vadd.f32 %v70, %v476
    %v509 = vadd.f32 %v71, %v477
    %v510 = vadd.f32 %v72, %v478
    %v511 = vadd.f32 %v73, %v479
    %v512 = vadd.f32 %v74, %v480
    %v513 = vld [vmem:[%s2 + $0x1] sm:$0x1]
    %v514 = vld [vmem:[%s2 + $0x2] sm:$0x1]
    %515 = vadd.xlane.f32.xlu0 %v481
    %v516 = vpop.xlane.xlu0 %515
    %517 = vadd.xlane.f32.xlu0 %v482
    %v518 = vpop.xlane.xlu0 %517
    %519 = vadd.xlane.f32.xlu0 %v483
    %v520 = vpop.xlane.xlu0 %519
    %521 = vadd.xlane.f32.xlu0 %v484
    %v522 = vpop.xlane.xlu0 %521
    %523 = vadd.xlane.f32.xlu0 %v485
    %v524 = vpop.xlane.xlu0 %523
    %525 = vadd.xlane.f32.xlu0 %v486
    %v526 = vpop.xlane.xlu0 %525
    %527 = vadd.xlane.f32.xlu0 %v487
    %v528 = vpop.xlane.xlu0 %527
    %529 = vadd.xlane.f32.xlu0 %v488
    %v530 = vpop.xlane.xlu0 %529
    %531 = vadd.xlane.f32.xlu0 %v489
    %v532 = vpop.xlane.xlu0 %531
    %533 = vadd.xlane.f32.xlu0 %v490
    %v534 = vpop.xlane.xlu0 %533
    %535 = vadd.xlane.f32.xlu0 %v491
    %v536 = vpop.xlane.xlu0 %535
    %537 = vadd.xlane.f32.xlu0 %v492
    %v538 = vpop.xlane.xlu0 %537
    %539 = vadd.xlane.f32.xlu0 %v493
    %v540 = vpop.xlane.xlu0 %539
    %541 = vadd.xlane.f32.xlu0 %v494
    %v542 = vpop.xlane.xlu0 %541
    %543 = vadd.xlane.f32.xlu0 %v495
    %v544 = vpop.xlane.xlu0 %543
    %545 = vadd.xlane.f32.xlu0 %v496
    %v546 = vpop.xlane.xlu0 %545
    %547 = vadd.xlane.f32.xlu0 %v497
    %v548 = vpop.xlane.xlu0 %547
    %549 = vadd.xlane.f32.xlu0 %v498
    %v550 = vpop.xlane.xlu0 %549
    %551 = vadd.xlane.f32.xlu0 %v499
    %v552 = vpop.xlane.xlu0 %551
    %553 = vadd.xlane.f32.xlu0 %v500
    %v554 = vpop.xlane.xlu0 %553
    %555 = vadd.xlane.f32.xlu0 %v501
    %v556 = vpop.xlane.xlu0 %555
    %557 = vadd.xlane.f32.xlu0 %v502
    %v558 = vpop.xlane.xlu0 %557
    %559 = vadd.xlane.f32.xlu0 %v503
    %v560 = vpop.xlane.xlu0 %559
    %561 = vadd.xlane.f32.xlu0 %v504
    %v562 = vpop.xlane.xlu0 %561
    %563 = vadd.xlane.f32.xlu0 %v505
    %v564 = vpop.xlane.xlu0 %563
    %565 = vadd.xlane.f32.xlu0 %v506
    %v566 = vpop.xlane.xlu0 %565
    %567 = vadd.xlane.f32.xlu0 %v507
    %v568 = vpop.xlane.xlu0 %567
    %569 = vadd.xlane.f32.xlu0 %v508
    %v570 = vpop.xlane.xlu0 %569
    %571 = vadd.xlane.f32.xlu0 %v509
    %v572 = vpop.xlane.xlu0 %571
    %573 = vadd.xlane.f32.xlu0 %v510
    %v574 = vpop.xlane.xlu0 %573
    %575 = vadd.xlane.f32.xlu0 %v511
    %v576 = vpop.xlane.xlu0 %575
    %577 = vadd.xlane.f32.xlu0 %v512
    %v578 = vpop.xlane.xlu0 %577
    %v579 = vmul.f32 %v516, 0.0078125
    %v580 = vmul.f32 %v518, 0.0078125
    %v581 = vmul.f32 %v520, 0.0078125
    %v582 = vmul.f32 %v522, 0.0078125
    %v583 = vmul.f32 %v524, 0.0078125
    %v584 = vmul.f32 %v526, 0.0078125
    %v585 = vmul.f32 %v528, 0.0078125
    %v586 = vmul.f32 %v530, 0.0078125
    %v587 = vmul.f32 %v532, 0.0078125
    %v588 = vmul.f32 %v534, 0.0078125
    %v589 = vmul.f32 %v536, 0.0078125
    %v590 = vmul.f32 %v538, 0.0078125
    %v591 = vmul.f32 %v540, 0.0078125
    %v592 = vmul.f32 %v542, 0.0078125
    %v593 = vmul.f32 %v544, 0.0078125
    %v594 = vmul.f32 %v546, 0.0078125
    %v595 = vmul.f32 %v548, 0.0078125
    %v596 = vmul.f32 %v550, 0.0078125
    %v597 = vmul.f32 %v552, 0.0078125
    %v598 = vmul.f32 %v554, 0.0078125
    %v599 = vmul.f32 %v556, 0.0078125
    %v600 = vmul.f32 %v558, 0.0078125
    %v601 = vmul.f32 %v560, 0.0078125
    %v602 = vmul.f32 %v562, 0.0078125
    %v603 = vmul.f32 %v564, 0.0078125
    %v604 = vmul.f32 %v566, 0.0078125
    %v605 = vmul.f32 %v568, 0.0078125
    %v606 = vmul.f32 %v570, 0.0078125
    %v607 = vmul.f32 %v572, 0.0078125
    %v608 = vmul.f32 %v574, 0.0078125
    %v609 = vmul.f32 %v576, 0.0078125
    %v610 = vmul.f32 %v578, 0.0078125
    %v611 = vsub.f32 %v481, %v579
    %v612 = vsub.f32 %v482, %v580
    %v613 = vsub.f32 %v483, %v581
    %v614 = vsub.f32 %v484, %v582
    %v615 = vsub.f32 %v485, %v583
    %v616 = vsub.f32 %v486, %v584
    %v617 = vsub.f32 %v487, %v585
    %v618 = vsub.f32 %v488, %v586
    %v619 = vsub.f32 %v489, %v587
    %v620 = vsub.f32 %v490, %v588
    %v621 = vsub.f32 %v491, %v589
    %v622 = vsub.f32 %v492, %v590
    %v623 = vsub.f32 %v493, %v591
    %v624 = vsub.f32 %v494, %v592
    %v625 = vsub.f32 %v495, %v593
    %v626 = vsub.f32 %v496, %v594
    %v627 = vsub.f32 %v497, %v595
    %v628 = vsub.f32 %v498, %v596
    %v629 = vsub.f32 %v499, %v597
    %v630 = vsub.f32 %v500, %v598
    %v631 = vsub.f32 %v501, %v599
    %v632 = vsub.f32 %v502, %v600
    %v633 = vsub.f32 %v503, %v601
    %v634 = vsub.f32 %v504, %v602
    %v635 = vsub.f32 %v505, %v603
    %v636 = vsub.f32 %v506, %v604
    %v637 = vsub.f32 %v507, %v605
    %v638 = vsub.f32 %v508, %v606
    %v639 = vsub.f32 %v509, %v607
    %v640 = vsub.f32 %v510, %v608
    %v641 = vsub.f32 %v511, %v609
    %v642 = vsub.f32 %v512, %v610
    %v643 = vmul.f32 %v611, %v611
    %v644 = vmul.f32 %v612, %v612
    %v645 = vmul.f32 %v613, %v613
    %v646 = vmul.f32 %v614, %v614
    %v647 = vmul.f32 %v615, %v615
    %v648 = vmul.f32 %v616, %v616
    %v649 = vmul.f32 %v617, %v617
    %v650 = vmul.f32 %v618, %v618
    %v651 = vmul.f32 %v619, %v619
    %v652 = vmul.f32 %v620, %v620
    %v653 = vmul.f32 %v621, %v621
    %v654 = vmul.f32 %v622, %v622
    %v655 = vmul.f32 %v623, %v623
    %v656 = vmul.f32 %v624, %v624
    %v657 = vmul.f32 %v625, %v625
    %v658 = vmul.f32 %v626, %v626
    %v659 = vmul.f32 %v627, %v627
    %v660 = vmul.f32 %v628, %v628
    %v661 = vmul.f32 %v629, %v629
    %v662 = vmul.f32 %v630, %v630
    %v663 = vmul.f32 %v631, %v631
    %v664 = vmul.f32 %v632, %v632
    %v665 = vmul.f32 %v633, %v633
    %v666 = vmul.f32 %v634, %v634
    %v667 = vmul.f32 %v635, %v635
    %v668 = vmul.f32 %v636, %v636
    %v669 = vmul.f32 %v637, %v637
    %v670 = vmul.f32 %v638, %v638
    %v671 = vmul.f32 %v639, %v639
    %v672 = vmul.f32 %v640, %v640
    %v673 = vmul.f32 %v641, %v641
    %v674 = vmul.f32 %v642, %v642
    %675 = vadd.xlane.f32.xlu0 %v643
    %v676 = vpop.xlane.xlu0 %675
    %677 = vadd.xlane.f32.xlu0 %v644
    %v678 = vpop.xlane.xlu0 %677
    %679 = vadd.xlane.f32.xlu0 %v645
    %v680 = vpop.xlane.xlu0 %679
    %681 = vadd.xlane.f32.xlu0 %v646
    %v682 = vpop.xlane.xlu0 %681
    %683 = vadd.xlane.f32.xlu0 %v647
    %v684 = vpop.xlane.xlu0 %683
    %685 = vadd.xlane.f32.xlu0 %v648
    %v686 = vpop.xlane.xlu0 %685
    %687 = vadd.xlane.f32.xlu0 %v649
    %v688 = vpop.xlane.xlu0 %687
    %689 = vadd.xlane.f32.xlu0 %v650
    %v690 = vpop.xlane.xlu0 %689
    %691 = vadd.xlane.f32.xlu0 %v651
    %v692 = vpop.xlane.xlu0 %691
    %693 = vadd.xlane.f32.xlu0 %v652
    %v694 = vpop.xlane.xlu0 %693
    %695 = vadd.xlane.f32.xlu0 %v653
    %v696 = vpop.xlane.xlu0 %695
    %697 = vadd.xlane.f32.xlu0 %v654
    %v698 = vpop.xlane.xlu0 %697
    %699 = vadd.xlane.f32.xlu0 %v655
    %v700 = vpop.xlane.xlu0 %699
    %701 = vadd.xlane.f32.xlu0 %v656
    %v702 = vpop.xlane.xlu0 %701
    %703 = vadd.xlane.f32.xlu0 %v657
    %v704 = vpop.xlane.xlu0 %703
    %705 = vadd.xlane.f32.xlu0 %v658
    %v706 = vpop.xlane.xlu0 %705
    %707 = vadd.xlane.f32.xlu0 %v659
    %v708 = vpop.xlane.xlu0 %707
    %709 = vadd.xlane.f32.xlu0 %v660
    %v710 = vpop.xlane.xlu0 %709
    %711 = vadd.xlane.f32.xlu0 %v661
    %v712 = vpop.xlane.xlu0 %711
    %713 = vadd.xlane.f32.xlu0 %v662
    %v714 = vpop.xlane.xlu0 %713
    %715 = vadd.xlane.f32.xlu0 %v663
    %v716 = vpop.xlane.xlu0 %715
    %717 = vadd.xlane.f32.xlu0 %v664
    %v718 = vpop.xlane.xlu0 %717
    %719 = vadd.xlane.f32.xlu0 %v665
    %v720 = vpop.xlane.xlu0 %719
    %721 = vadd.xlane.f32.xlu0 %v666
    %v722 = vpop.xlane.xlu0 %721
    %723 = vadd.xlane.f32.xlu0 %v667
    %v724 = vpop.xlane.xlu0 %723
    %725 = vadd.xlane.f32.xlu0 %v668
    %v726 = vpop.xlane.xlu0 %725
    %727 = vadd.xlane.f32.xlu0 %v669
    %v728 = vpop.xlane.xlu0 %727
    %729 = vadd.xlane.f32.xlu0 %v670
    %v730 = vpop.xlane.xlu0 %729
    %731 = vadd.xlane.f32.xlu0 %v671
    %v732 = vpop.xlane.xlu0 %731
    %733 = vadd.xlane.f32.xlu0 %v672
    %v734 = vpop.xlane.xlu0 %733
    %735 = vadd.xlane.f32.xlu0 %v673
    %v736 = vpop.xlane.xlu0 %735
    %737 = vadd.xlane.f32.xlu0 %v674
    %v738 = vpop.xlane.xlu0 %737
    %v739 = vmul.f32 %v676, 0.0078125
    %v740 = vmul.f32 %v678, 0.0078125
    %v741 = vmul.f32 %v680, 0.0078125
    %v742 = vmul.f32 %v682, 0.0078125
    %v743 = vmul.f32 %v684, 0.0078125
    %v744 = vmul.f32 %v686, 0.0078125
    %v745 = vmul.f32 %v688, 0.0078125
    %v746 = vmul.f32 %v690, 0.0078125
    %v747 = vmul.f32 %v692, 0.0078125
    %v748 = vmul.f32 %v694, 0.0078125
    %v749 = vmul.f32 %v696, 0.0078125
    %v750 = vmul.f32 %v698, 0.0078125
    %v751 = vmul.f32 %v700, 0.0078125
    %v752 = vmul.f32 %v702, 0.0078125
    %v753 = vmul.f32 %v704, 0.0078125
    %v754 = vmul.f32 %v706, 0.0078125
    %v755 = vmul.f32 %v708, 0.0078125
    %v756 = vmul.f32 %v710, 0.0078125
    %v757 = vmul.f32 %v712, 0.0078125
    %v758 = vmul.f32 %v714, 0.0078125
    %v759 = vmul.f32 %v716, 0.0078125
    %v760 = vmul.f32 %v718, 0.0078125
    %v761 = vmul.f32 %v720, 0.0078125
    %v762 = vmul.f32 %v722, 0.0078125
    %v763 = vmul.f32 %v724, 0.0078125
    %v764 = vmul.f32 %v726, 0.0078125
    %v765 = vmul.f32 %v728, 0.0078125
    %v766 = vmul.f32 %v730, 0.0078125
    %v767 = vmul.f32 %v732, 0.0078125
    %v768 = vmul.f32 %v734, 0.0078125
    %v769 = vmul.f32 %v736, 0.0078125
    %v770 = vmul.f32 %v738, 0.0078125
    %v771 = vadd.f32 %v739, 1e-05
    %v772 = vadd.f32 %v740, 1e-05
    %v773 = vadd.f32 %v741, 1e-05
    %v774 = vadd.f32 %v742, 1e-05
    %v775 = vadd.f32 %v743, 1e-05
    %v776 = vadd.f32 %v744, 1e-05
    %v777 = vadd.f32 %v745, 1e-05
    %v778 = vadd.f32 %v746, 1e-05
    %v779 = vadd.f32 %v747, 1e-05
    %v780 = vadd.f32 %v748, 1e-05
    %v781 = vadd.f32 %v749, 1e-05
    %v782 = vadd.f32 %v750, 1e-05
    %v783 = vadd.f32 %v751, 1e-05
    %v784 = vadd.f32 %v752, 1e-05
    %v785 = vadd.f32 %v753, 1e-05
    %v786 = vadd.f32 %v754, 1e-05
    %v787 = vadd.f32 %v755, 1e-05
    %v788 = vadd.f32 %v756, 1e-05
    %v789 = vadd.f32 %v757, 1e-05
    %v790 = vadd.f32 %v758, 1e-05
    %v791 = vadd.f32 %v759, 1e-05
    %v792 = vadd.f32 %v760, 1e-05
    %v793 = vadd.f32 %v761, 1e-05
    %v794 = vadd.f32 %v762, 1e-05
    %v795 = vadd.f32 %v763, 1e-05
    %v796 = vadd.f32 %v764, 1e-05
    %v797 = vadd.f32 %v765, 1e-05
    %v798 = vadd.f32 %v766, 1e-05
    %v799 = vadd.f32 %v767, 1e-05
    %v800 = vadd.f32 %v768, 1e-05
    %v801 = vadd.f32 %v769, 1e-05
    %v802 = vadd.f32 %v770, 1e-05
    %v803 = vrsqrt.pop %v771
    %v804 = vrsqrt.pop %v772
    %v805 = vrsqrt.pop %v773
    %v806 = vrsqrt.pop %v774
    %v807 = vrsqrt.pop %v775
    %v808 = vrsqrt.pop %v776
    %v809 = vrsqrt.pop %v777
    %v810 = vrsqrt.pop %v778
    %v811 = vrsqrt.pop %v779
    %v812 = vrsqrt.pop %v780
    %v813 = vrsqrt.pop %v781
    %v814 = vrsqrt.pop %v782
    %v815 = vrsqrt.pop %v783
    %v816 = vrsqrt.pop %v784
    %v817 = vrsqrt.pop %v785
    %v818 = vrsqrt.pop %v786
    %v819 = vrsqrt.pop %v787
    %v820 = vrsqrt.pop %v788
    %v821 = vrsqrt.pop %v789
    %v822 = vrsqrt.pop %v790
    %v823 = vrsqrt.pop %v791
    %v824 = vrsqrt.pop %v792
    %v825 = vrsqrt.pop %v793
    %v826 = vrsqrt.pop %v794
    %v827 = vrsqrt.pop %v795
    %v828 = vrsqrt.pop %v796
    %v829 = vrsqrt.pop %v797
    %v830 = vrsqrt.pop %v798
    %v831 = vrsqrt.pop %v799
    %v832 = vrsqrt.pop %v800
    %v833 = vrsqrt.pop %v801
    %v834 = vrsqrt.pop %v802
    %v835 = vmul.f32 %v611, %v803
    %v836 = vmul.f32 %v612, %v804
    %v837 = vmul.f32 %v613, %v805
    %v838 = vmul.f32 %v614, %v806
    %v839 = vmul.f32 %v615, %v807
    %v840 = vmul.f32 %v616, %v808
    %v841 = vmul.f32 %v617, %v809
    %v842 = vmul.f32 %v618, %v810
    %v843 = vmul.f32 %v619, %v811
    %v844 = vmul.f32 %v620, %v812
    %v845 = vmul.f32 %v621, %v813
    %v846 = vmul.f32 %v622, %v814
    %v847 = vmul.f32 %v623, %v815
    %v848 = vmul.f32 %v624, %v816
    %v849 = vmul.f32 %v625, %v817
    %v850 = vmul.f32 %v626, %v818
    %v851 = vmul.f32 %v627, %v819
    %v852 = vmul.f32 %v628, %v820
    %v853 = vmul.f32 %v629, %v821
    %v854 = vmul.f32 %v630, %v822
    %v855 = vmul.f32 %v631, %v823
    %v856 = vmul.f32 %v632, %v824
    %v857 = vmul.f32 %v633, %v825
    %v858 = vmul.f32 %v634, %v826
    %v859 = vmul.f32 %v635, %v827
    %v860 = vmul.f32 %v636, %v828
    %v861 = vmul.f32 %v637, %v829
    %v862 = vmul.f32 %v638, %v830
    %v863 = vmul.f32 %v639, %v831
    %v864 = vmul.f32 %v640, %v832
    %v865 = vmul.f32 %v641, %v833
    %v866 = vmul.f32 %v642, %v834
    %v867 = vlaneseq
    %v868 = vshrl.u32 %v867, 7
    %v869 = vsub.s32 0, %v868
    %v870 = vrot.slane %v513, %v869
    %v871 = vmul.f32 %v835, %v870
    %v872 = vmul.f32 %v836, %v870
    %v873 = vmul.f32 %v837, %v870
    %v874 = vmul.f32 %v838, %v870
    %v875 = vmul.f32 %v839, %v870
    %v876 = vmul.f32 %v840, %v870
    %v877 = vmul.f32 %v841, %v870
    %v878 = vmul.f32 %v842, %v870
    %v879 = vmul.f32 %v843, %v870
    %v880 = vmul.f32 %v844, %v870
    %v881 = vmul.f32 %v845, %v870
    %v882 = vmul.f32 %v846, %v870
    %v883 = vmul.f32 %v847, %v870
    %v884 = vmul.f32 %v848, %v870
    %v885 = vmul.f32 %v849, %v870
    %v886 = vmul.f32 %v850, %v870
    %v887 = vmul.f32 %v851, %v870
    %v888 = vmul.f32 %v852, %v870
    %v889 = vmul.f32 %v853, %v870
    %v890 = vmul.f32 %v854, %v870
    %v891 = vmul.f32 %v855, %v870
    %v892 = vmul.f32 %v856, %v870
    %v893 = vmul.f32 %v857, %v870
    %v894 = vmul.f32 %v858, %v870
    %v895 = vmul.f32 %v859, %v870
    %v896 = vmul.f32 %v860, %v870
    %v897 = vmul.f32 %v861, %v870
    %v898 = vmul.f32 %v862, %v870
    %v899 = vmul.f32 %v863, %v870
    %v900 = vmul.f32 %v864, %v870
    %v901 = vmul.f32 %v865, %v870
    %v902 = vmul.f32 %v866, %v870
    %v903 = vlaneseq
    %v904 = vshrl.u32 %v903, 7
    %v905 = vsub.s32 0, %v904
    %v906 = vrot.slane %v514, %v905
    %v907 = vadd.f32 %v871, %v906
    %v908 = vadd.f32 %v872, %v906
    %v909 = vadd.f32 %v873, %v906
    %v910 = vadd.f32 %v874, %v906
    %v911 = vadd.f32 %v875, %v906
    %v912 = vadd.f32 %v876, %v906
    %v913 = vadd.f32 %v877, %v906
    %v914 = vadd.f32 %v878, %v906
    %v915 = vadd.f32 %v879, %v906
    %v916 = vadd.f32 %v880, %v906
    %v917 = vadd.f32 %v881, %v906
    %v918 = vadd.f32 %v882, %v906
    %v919 = vadd.f32 %v883, %v906
    %v920 = vadd.f32 %v884, %v906
    %v921 = vadd.f32 %v885, %v906
    %v922 = vadd.f32 %v886, %v906
    %v923 = vadd.f32 %v887, %v906
    %v924 = vadd.f32 %v888, %v906
    %v925 = vadd.f32 %v889, %v906
    %v926 = vadd.f32 %v890, %v906
    %v927 = vadd.f32 %v891, %v906
    %v928 = vadd.f32 %v892, %v906
    %v929 = vadd.f32 %v893, %v906
    %v930 = vadd.f32 %v894, %v906
    %v931 = vadd.f32 %v895, %v906
    %v932 = vadd.f32 %v896, %v906
    %v933 = vadd.f32 %v897, %v906
    %v934 = vadd.f32 %v898, %v906
    %v935 = vadd.f32 %v899, %v906
    %v936 = vadd.f32 %v900, %v906
    %v937 = vadd.f32 %v901, %v906
    %v938 = vadd.f32 %v902, %v906
    %939 = vst [vmem:[#allocation7] sm:$0xff] %v907
    %940 = vst [vmem:[#allocation7 + $0x8] sm:$0xff] %v908
    %941 = vst [vmem:[#allocation7 + $0x10] sm:$0xff] %v909
    %942 = vst [vmem:[#allocation7 + $0x18] sm:$0xff] %v910
    %943 = vst [vmem:[#allocation7 + $0x20] sm:$0xff] %v911
    %944 = vst [vmem:[#allocation7 + $0x28] sm:$0xff] %v912
    %945 = vst [vmem:[#allocation7 + $0x30] sm:$0xff] %v913
    %946 = vst [vmem:[#allocation7 + $0x38] sm:$0xff] %v914
    %947 = vst [vmem:[#allocation7 + $0x40] sm:$0xff] %v915
    %948 = vst [vmem:[#allocation7 + $0x48] sm:$0xff] %v916
    %949 = vst [vmem:[#allocation7 + $0x50] sm:$0xff] %v917
    %950 = vst [vmem:[#allocation7 + $0x58] sm:$0xff] %v918
    %951 = vst [vmem:[#allocation7 + $0x60] sm:$0xff] %v919
    %952 = vst [vmem:[#allocation7 + $0x68] sm:$0xff] %v920
    %953 = vst [vmem:[#allocation7 + $0x70] sm:$0xff] %v921
    %954 = vst [vmem:[#allocation7 + $0x78] sm:$0xff] %v922
    %955 = vst [vmem:[#allocation7 + $0x80] sm:$0xff] %v923
    %956 = vst [vmem:[#allocation7 + $0x88] sm:$0xff] %v924
    %957 = vst [vmem:[#allocation7 + $0x90] sm:$0xff] %v925
    %958 = vst [vmem:[#allocation7 + $0x98] sm:$0xff] %v926
    %959 = vst [vmem:[#allocation7 + $0xa0] sm:$0xff] %v927
    %960 = vst [vmem:[#allocation7 + $0xa8] sm:$0xff] %v928
    %961 = vst [vmem:[#allocation7 + $0xb0] sm:$0xff] %v929
    %962 = vst [vmem:[#allocation7 + $0xb8] sm:$0xff] %v930
    %963 = vst [vmem:[#allocation7 + $0xc0] sm:$0xff] %v931
    %964 = vst [vmem:[#allocation7 + $0xc8] sm:$0xff] %v932
    %965 = vst [vmem:[#allocation7 + $0xd0] sm:$0xff] %v933
    %966 = vst [vmem:[#allocation7 + $0xd8] sm:$0xff] %v934
    %967 = vst [vmem:[#allocation7 + $0xe0] sm:$0xff] %v935
    %968 = vst [vmem:[#allocation7 + $0xe8] sm:$0xff] %v936
    %969 = vst [vmem:[#allocation7 + $0xf0] sm:$0xff] %v937
    %970 = vst [vmem:[#allocation7 + $0xf8] sm:$0xff] %v938
    // Predicated region
    $region22: #{tpu_custom_call.1} parent=1 // pred_check
      _
    $region23: #{tpu_custom_call.1} parent=1 // pred_check_branch
      %972 = sbr.rel (0) target = $region25
    $region24: #{tpu_custom_call.1} parent=1 // pred_region
      %s974 = ssub.s32 4096, 4096
      %975 = vsyncadd [#allocation4], %s974
      %s976 = sshll.u32 [#allocation7], 4
      %s977 = int_to_ptr.vmem [resolvable:$true] %s976
      %982 = dma.vmem_to_hbm [thread:$0]  %s977, 4096, %s3, [#allocation4], 128, 128, 8
    $region25: #{tpu_custom_call.1} parent=1 // pred_fallthru
      _
    // Predicated region
    $region26: #{tpu_custom_call.1} parent=1 // pred_check
      _
    $region27: #{tpu_custom_call.1} parent=1 // pred_check_branch
      %984 = sbr.rel (0) target = $region29
    $region28: #{tpu_custom_call.1} parent=1 // pred_region
      %985 = dma.done [#allocation4], 4096
    $region29: #{tpu_custom_call.1} parent=1 // pred_fallthru
      _
    %986 = vsyncpa [#allocation3], 1
    %987 = vsyncpa [#allocation6], 1
    %988 = vsyncpa [#allocation4], 1

</llo_original>
